<compile_context>
chip_gen: v7x
topology: tpu7x:2x2x1
jax: 0.10.0
libtpu: 0.0.40
codegen_flags: <defaults>
</compile_context>

<pallas_src>
import functools

import jax
import jax.numpy as jnp
from jax.experimental import pallas as pl
from jax.experimental.pallas import tpu as pltpu


def mlp_kernel(x_ref, w1_ref, b1_ref, w2_ref, b2_ref, o_ref):
    # fc1: [TB, I] @ [I, H] + [1, H], bias + ReLU epilogue in f32
    # (no bf16 intermediate — v5e has no bf16 VPU).
    h = jnp.dot(x_ref[...], w1_ref[...], preferred_element_type=jnp.float32)
    h = jnp.maximum(h + b1_ref[...], 0.0)
    # fc2: [TB, H] @ [H, O] + [1, O]  (O kept unpadded; exact-size writeback)
    out = jnp.dot(h, w2_ref[...], preferred_element_type=jnp.float32)
    o_ref[...] = (out + b2_ref[...]).astype(o_ref.dtype)


def _round_up(n, m):
    return -(-n // m) * m


@functools.partial(jax.jit, static_argnames=("block_b",))
def simple_model_forward(x, w1, b1, w2, b2, *, block_b=None):
    """x: [B, I]; w1: [I, H]; b1: [1, H]; w2: [H, O]; b2: [1, O] -> [B, O]."""
    B, I = x.shape
    H = w1.shape[1]
    O = w2.shape[1]

    if block_b is None:
        # Target exactly 2 grid steps: amortizes the ~0.35 us/step Pallas
        # overhead while still giving v7x's second TensorCore a tile to work
        # on.  Minimum 8 rows (sublane multiple).
        block_b = max(8, _round_up(pl.cdiv(B, 2), 8))
    # (block_b, I)/(block_b, O) blocks need a sublane-aligned leading dim.
    assert block_b % 8 == 0, "block_b must be a multiple of 8 (sublanes)"

    grid = (pl.cdiv(B, block_b),)  # partial last block handled by Pallas

    cost = pl.CostEstimate(
        flops=2 * B * (I * H + H * O),
        transcendentals=0,
        bytes_accessed=4 * (B * I + I * H + H + H * O + O + B * O),
    )

    return pl.pallas_call(
        mlp_kernel,
        out_shape=jax.ShapeDtypeStruct((B, O), jnp.float32),
        grid_spec=pl.GridSpec(
            grid=grid,
            in_specs=[
                # x: one row-tile per grid step (double-buffered pipeline)
                pl.BlockSpec((block_b, I), lambda i: (i, 0)),
                # weights / biases: whole-array, VMEM-resident across steps
                pl.BlockSpec((I, H), lambda i: (0, 0)),
                pl.BlockSpec((1, H), lambda i: (0, 0)),
                pl.BlockSpec((H, O), lambda i: (0, 0)),
                pl.BlockSpec((1, O), lambda i: (0, 0)),
            ],
            out_specs=pl.BlockSpec((block_b, O), lambda i: (i, 0)),
        ),
        compiler_params=pltpu.CompilerParams(
            # Batch tiles are independent -> shard across v7x's 2 TensorCores.
            dimension_semantics=("parallel",),
        ),
        cost_estimate=cost,
    )(x, w1, b1, w2, b2)


def init_params(key, input_size=10, hidden_size=20, output_size=2):
    """Deterministic init mimicking nn.Linear default (uniform +/- 1/sqrt(fan_in))."""
    k1, k2, k3, k4 = jax.random.split(key, 4)
    bound1 = 1.0 / jnp.sqrt(input_size)
    bound2 = 1.0 / jnp.sqrt(hidden_size)
    # Stored as [in, out] (already transposed relative to PyTorch's [out, in]).
    w1 = jax.random.uniform(k1, (input_size, hidden_size), jnp.float32, -bound1, bound1)
    b1 = jax.random.uniform(k2, (1, hidden_size), jnp.float32, -bound1, bound1)
    w2 = jax.random.uniform(k3, (hidden_size, output_size), jnp.float32, -bound2, bound2)
    b2 = jax.random.uniform(k4, (1, output_size), jnp.float32, -bound2, bound2)
    return w1, b1, w2, b2


if __name__ == "__main__":
    key = jax.random.PRNGKey(0)
    kx, kp = jax.random.split(key)

    # Model dims from the PyTorch module; batch gives 2 row tiles of 128.
    batch, input_size, hidden_size, output_size = 256, 10, 20, 2
    x = jax.random.normal(kx, (batch, input_size), jnp.float32)
    w1, b1, w2, b2 = init_params(kp, input_size, hidden_size, output_size)

    out = jax.block_until_ready(simple_model_forward(x, w1, b1, w2, b2))

    # Reference check in plain JAX (same math as PyTorch forward).
    ref = jnp.maximum(x @ w1 + b1, 0.0) @ w2 + b2
    assert out.shape == (batch, output_size)
    assert jnp.allclose(out, ref, atol=1e-5, rtol=1e-5)

    # Non-tile-multiple batch: exercises the partial last block (no wrapper
    # pad/slice ops) — last tile's OOB rows are masked out by Pallas.
    out_ragged = jax.block_until_ready(
        simple_model_forward(x[:200], w1, b1, w2, b2)
    )
    assert out_ragged.shape == (200, output_size)
    assert jnp.allclose(out_ragged, ref[:200], atol=1e-5, rtol=1e-5)

    # Tiny batch: collapses to a single 8-row grid step.
    out_small = jax.block_until_ready(
        simple_model_forward(x[:8], w1, b1, w2, b2)
    )
    assert out_small.shape == (8, output_size)
    assert jnp.allclose(out_small, ref[:8], atol=1e-5, rtol=1e-5)

    print("KERNEL_OK")
</pallas_src>

<mosaic_0001>
module attributes {stable_mosaic.version = 11 : i64} {
  func.func @mlp_kernel(%arg0: i32, %arg1: memref<128x10xf32, #tpu.memory_space<vmem>>, %arg2: memref<10x20xf32, #tpu.memory_space<vmem>>, %arg3: memref<1x20xf32, #tpu.memory_space<vmem>>, %arg4: memref<20x2xf32, #tpu.memory_space<vmem>>, %arg5: memref<1x2xf32, #tpu.memory_space<vmem>>, %arg6: memref<128x2xf32, #tpu.memory_space<vmem>>) attributes {dimension_semantics = [#tpu.dimension_semantics<parallel>], iteration_bounds = array<i64: 2>, scalar_prefetch = 0 : i64, scratch_operands = 0 : i64, tpu.core_type = #tpu.core_type<tc>, window_params = [{transform_indices = @transform_0, window_bounds = array<i64: 128, 10>}, {pipeline_mode = #tpu.pipeline_mode<synchronous>, transform_indices = @transform_1, window_bounds = array<i64: 10, 20>}, {pipeline_mode = #tpu.pipeline_mode<synchronous>, transform_indices = @transform_2, window_bounds = array<i64: 1, 20>}, {pipeline_mode = #tpu.pipeline_mode<synchronous>, transform_indices = @transform_3, window_bounds = array<i64: 20, 2>}, {pipeline_mode = #tpu.pipeline_mode<synchronous>, transform_indices = @transform_4, window_bounds = array<i64: 1, 2>}, {transform_indices = @transform_5, window_bounds = array<i64: 128, 2>}]} {
    %c0 = arith.constant 0 : index
    %c0_0 = arith.constant 0 : index
    %0 = vector.load %arg1[%c0, %c0_0] : memref<128x10xf32, #tpu.memory_space<vmem>>, vector<128x10xf32>
    %c0_1 = arith.constant 0 : index
    %c0_2 = arith.constant 0 : index
    %1 = vector.load %arg2[%c0_1, %c0_2] : memref<10x20xf32, #tpu.memory_space<vmem>>, vector<10x20xf32>
    %cst = arith.constant dense<0.000000e+00> : vector<128x20xf32>
    %2 = tpu.matmul %0, %1, %cst {dimension_numbers = #tpu.dot_dimension_numbers<[1], [0], [0], [1], [0, 0, 1, 1], [], []>} : vector<128x10xf32>, vector<10x20xf32>, vector<128x20xf32> -> vector<128x20xf32>
    %c0_3 = arith.constant 0 : index
    %c0_4 = arith.constant 0 : index
    %3 = vector.load %arg3[%c0_3, %c0_4] : memref<1x20xf32, #tpu.memory_space<vmem>>, vector<1x20xf32>
    %4 = vector.broadcast %3 : vector<1x20xf32> to vector<128x20xf32>
    %5 = arith.addf %2, %4 : vector<128x20xf32>
    %cst_5 = arith.constant 0.000000e+00 : f32
    %6 = vector.broadcast %cst_5 : f32 to vector<128x20xf32>
    %7 = arith.maximumf %5, %6 : vector<128x20xf32>
    %c0_6 = arith.constant 0 : index
    %c0_7 = arith.constant 0 : index
    %8 = vector.load %arg4[%c0_6, %c0_7] : memref<20x2xf32, #tpu.memory_space<vmem>>, vector<20x2xf32>
    %cst_8 = arith.constant dense<0.000000e+00> : vector<128x2xf32>
    %9 = tpu.matmul %7, %8, %cst_8 {dimension_numbers = #tpu.dot_dimension_numbers<[1], [0], [0], [1], [0, 0, 1, 1], [], []>} : vector<128x20xf32>, vector<20x2xf32>, vector<128x2xf32> -> vector<128x2xf32>
    %c0_9 = arith.constant 0 : index
    %c0_10 = arith.constant 0 : index
    %10 = vector.load %arg5[%c0_9, %c0_10] : memref<1x2xf32, #tpu.memory_space<vmem>>, vector<1x2xf32>
    %11 = vector.broadcast %10 : vector<1x2xf32> to vector<128x2xf32>
    %12 = arith.addf %9, %11 : vector<128x2xf32>
    %c0_11 = arith.constant 0 : index
    %c0_12 = arith.constant 0 : index
    %13 = vector.load %arg6[%c0_11, %c0_12] : memref<128x2xf32, #tpu.memory_space<vmem>>, vector<128x2xf32>
    tpu.vector_store %arg6[%c0_11, %c0_12], %12 {strides = array<i32>} : memref<128x2xf32, #tpu.memory_space<vmem>>, vector<128x2xf32>,
    return
  }
  func.func @transform_0(%arg0: i32) -> (i32, i32) {
    %c0_i32 = arith.constant 0 : i32
    %c0_i32_0 = arith.constant 0 : i32
    return %arg0, %c0_i32 : i32, i32
  }
  func.func @transform_1(%arg0: i32) -> (i32, i32) {
    %c0_i32 = arith.constant 0 : i32
    %c0_i32_0 = arith.constant 0 : i32
    %c0_i32_1 = arith.constant 0 : i32
    return %c0_i32, %c0_i32_0 : i32, i32
  }
  func.func @transform_2(%arg0: i32) -> (i32, i32) {
    %c0_i32 = arith.constant 0 : i32
    %c0_i32_0 = arith.constant 0 : i32
    %c0_i32_1 = arith.constant 0 : i32
    return %c0_i32, %c0_i32_0 : i32, i32
  }
  func.func @transform_3(%arg0: i32) -> (i32, i32) {
    %c0_i32 = arith.constant 0 : i32
    %c0_i32_0 = arith.constant 0 : i32
    %c0_i32_1 = arith.constant 0 : i32
    return %c0_i32, %c0_i32_0 : i32, i32
  }
  func.func @transform_4(%arg0: i32) -> (i32, i32) {
    %c0_i32 = arith.constant 0 : i32
    %c0_i32_0 = arith.constant 0 : i32
    %c0_i32_1 = arith.constant 0 : i32
    return %c0_i32, %c0_i32_0 : i32, i32
  }
  func.func @transform_5(%arg0: i32) -> (i32, i32) {
    %c0_i32 = arith.constant 0 : i32
    %c0_i32_0 = arith.constant 0 : i32
    return %arg0, %c0_i32 : i32, i32
  }
}

</mosaic_0001>

<llo_original>
// kernel: simple_model_forward.1
$region0: #{simple_model_forward.1}
  #allocation0 [shape = 'u32[]', space=smem, size = 0x4, offset = 0x4, fixed_abs, tag = 'smem constant byte address 0x4 - core index']
  #allocation1 [shape = 'u32[144,128]{1,0:T(1,128)}', space=vmem, size = 0x12000, scoped, tag = 'internal scratch']
  %s0 = inlined_call_operand.vmem [shape: f32[256,10], index: 0, kind: input, shape index: {}]
  %s1 = inlined_call_operand.vmem [shape: f32[10,20], index: 1, kind: input, shape index: {}]
  %s2 = inlined_call_operand.vmem [shape: f32[1,20], index: 2, kind: input, shape index: {}]
  %s3 = inlined_call_operand.vmem [shape: f32[20,2], index: 3, kind: input, shape index: {}]
  %s4 = inlined_call_operand.vmem [shape: f32[1,2], index: 4, kind: input, shape index: {}]
  %s5 = inlined_call_operand.vmem [shape: f32[256,2], index: 5, kind: output, shape index: {}]
  %s6 = sld [smem:[#allocation0]]
  $region53: #{simple_model_forward.1} parent=0
    _
  %s8 = ssub.s32 1, %s6
  %s9 = scalar_select 0, %s8, %s6
  loop: start=0, step=1, limit=4
  $region2: #{simple_model_forward.1} parent=0 // loop_pre_header
    _
  $region3: #{simple_model_forward.1} parent=0 // loop_header
    %s11 = sphi 0, %s15
    %p12 = scmp.ge.s32.totalorder %s11, 4
    %s21 = sphi 0, %s23
    %s24 = sphi 0, %s21
    %s25 = sphi 0, %s24
    %s41 = sphi 0, %s25
    %s45 = sphi 0, %s45
    %s47 = sphi 0, %s45
    %s48 = sphi 0, %s47
    %s62 = sphi 0, %s48
    %s66 = sphi 0, %s66
    %s68 = sphi 0, %s66
    %s69 = sphi 0, %s68
    %s83 = sphi 0, %s69
    %s87 = sphi 0, %s87
    %s89 = sphi 0, %s87
    %s90 = sphi 0, %s89
    %s104 = sphi 0, %s90
    %s108 = sphi 0, %s108
    %s110 = sphi 0, %s108
    %s111 = sphi 0, %s110
    %s125 = sphi 0, %s111
    %s131 = sphi 0, %s133
    %s134 = sphi 0, %s131
    %s135 = sphi 0, %s134
    %s151 = sphi 0, %s135
  $region4: #{simple_model_forward.1} parent=0 // loop_header_branch
    %14 = sbr.rel (%p12) target = $region8
  $region5: #{simple_model_forward.1} parent=0 // loop_body
    %s16 = ssub.s32 %s11, 1
    %s17 = ssub.s32 %s11, 2
    %s18 = sadd.s32 %s11, 1
    %s19 = ssub.s32 %s11, %s18
    %p20 = scmp.eq.s32.totalorder %s19, 0
    %s22 = sadd.s32 %s21, 1
    %s23 = scalar_select %p20, %s21, %s22
    %p26 = pneg %p20
    %p27 = scmp.eq.s32.totalorder %s11, 1
    %p28 = por %p26, %p27
    %p29 = scmp.ne.s32.totalorder %s21, %s24
    %p30 = scmp.eq.s32.totalorder %s11, 0
    %p31 = por %p29, %p30
    %p32 = scmp.ne.s32.totalorder %s21, %s24
    %p33 = scmp.eq.s32.totalorder %s16, 1
    %p34 = por %p32, %p33
    %p35 = scmp.ne.s32.totalorder %s24, %s25
    %p36 = scmp.eq.s32.totalorder %s16, 0
    %p37 = por %p35, %p36
    %p38 = scmp.ne.s32.totalorder %s24, %s25
    %p39 = scmp.eq.s32.totalorder %s17, 1
    %p40 = por %p38, %p39
    %p42 = scmp.ne.s32.totalorder %s25, %s41
    %p43 = scmp.eq.s32.totalorder %s17, 0
    %p44 = por %p42, %p43
    %s46 = sadd.s32 %s45, 1
    %p49 = scmp.eq.s32.totalorder %s11, 1
    %p50 = scmp.ne.s32.totalorder %s45, %s47
    %p51 = scmp.eq.s32.totalorder %s11, 0
    %p52 = por %p50, %p51
    %p53 = scmp.ne.s32.totalorder %s45, %s47
    %p54 = scmp.eq.s32.totalorder %s16, 1
    %p55 = por %p53, %p54
    %p56 = scmp.ne.s32.totalorder %s47, %s48
    %p57 = scmp.eq.s32.totalorder %s16, 0
    %p58 = por %p56, %p57
    %p59 = scmp.ne.s32.totalorder %s47, %s48
    %p60 = scmp.eq.s32.totalorder %s17, 1
    %p61 = por %p59, %p60
    %p63 = scmp.ne.s32.totalorder %s48, %s62
    %p64 = scmp.eq.s32.totalorder %s17, 0
    %p65 = por %p63, %p64
    %s67 = sadd.s32 %s66, 1
    %p70 = scmp.eq.s32.totalorder %s11, 1
    %p71 = scmp.ne.s32.totalorder %s66, %s68
    %p72 = scmp.eq.s32.totalorder %s11, 0
    %p73 = por %p71, %p72
    %p74 = scmp.ne.s32.totalorder %s66, %s68
    %p75 = scmp.eq.s32.totalorder %s16, 1
    %p76 = por %p74, %p75
    %p77 = scmp.ne.s32.totalorder %s68, %s69
    %p78 = scmp.eq.s32.totalorder %s16, 0
    %p79 = por %p77, %p78
    %p80 = scmp.ne.s32.totalorder %s68, %s69
    %p81 = scmp.eq.s32.totalorder %s17, 1
    %p82 = por %p80, %p81
    %p84 = scmp.ne.s32.totalorder %s69, %s83
    %p85 = scmp.eq.s32.totalorder %s17, 0
    %p86 = por %p84, %p85
    %s88 = sadd.s32 %s87, 1
    %p91 = scmp.eq.s32.totalorder %s11, 1
    %p92 = scmp.ne.s32.totalorder %s87, %s89
    %p93 = scmp.eq.s32.totalorder %s11, 0
    %p94 = por %p92, %p93
    %p95 = scmp.ne.s32.totalorder %s87, %s89
    %p96 = scmp.eq.s32.totalorder %s16, 1
    %p97 = por %p95, %p96
    %p98 = scmp.ne.s32.totalorder %s89, %s90
    %p99 = scmp.eq.s32.totalorder %s16, 0
    %p100 = por %p98, %p99
    %p101 = scmp.ne.s32.totalorder %s89, %s90
    %p102 = scmp.eq.s32.totalorder %s17, 1
    %p103 = por %p101, %p102
    %p105 = scmp.ne.s32.totalorder %s90, %s104
    %p106 = scmp.eq.s32.totalorder %s17, 0
    %p107 = por %p105, %p106
    %s109 = sadd.s32 %s108, 1
    %p112 = scmp.eq.s32.totalorder %s11, 1
    %p113 = scmp.ne.s32.totalorder %s108, %s110
    %p114 = scmp.eq.s32.totalorder %s11, 0
    %p115 = por %p113, %p114
    %p116 = scmp.ne.s32.totalorder %s108, %s110
    %p117 = scmp.eq.s32.totalorder %s16, 1
    %p118 = por %p116, %p117
    %p119 = scmp.ne.s32.totalorder %s110, %s111
    %p120 = scmp.eq.s32.totalorder %s16, 0
    %p121 = por %p119, %p120
    %p122 = scmp.ne.s32.totalorder %s110, %s111
    %p123 = scmp.eq.s32.totalorder %s17, 1
    %p124 = por %p122, %p123
    %p126 = scmp.ne.s32.totalorder %s111, %s125
    %p127 = scmp.eq.s32.totalorder %s17, 0
    %p128 = por %p126, %p127
    %s129 = ssub.s32 %s11, %s18
    %p130 = scmp.eq.s32.totalorder %s129, 0
    %s132 = sadd.s32 %s131, 1
    %s133 = scalar_select %p130, %s131, %s132
    %p136 = pneg %p130
    %p137 = scmp.eq.s32.totalorder %s11, 1
    %p138 = por %p136, %p137
    %p139 = scmp.ne.s32.totalorder %s131, %s134
    %p140 = scmp.eq.s32.totalorder %s11, 0
    %p141 = por %p139, %p140
    %p142 = scmp.ne.s32.totalorder %s131, %s134
    %p143 = scmp.eq.s32.totalorder %s16, 1
    %p144 = por %p142, %p143
    %p145 = scmp.ne.s32.totalorder %s134, %s135
    %p146 = scmp.eq.s32.totalorder %s16, 0
    %p147 = por %p145, %p146
    %p148 = scmp.ne.s32.totalorder %s134, %s135
    %p149 = scmp.eq.s32.totalorder %s17, 1
    %p150 = por %p148, %p149
    %p152 = scmp.ne.s32.totalorder %s135, %s151
    %p153 = scmp.eq.s32.totalorder %s17, 0
    %p154 = por %p152, %p153
    %p155 = scmp.le.s32.totalorder 1, %s11
    %p156 = scmp.lt.s32.totalorder %s11, 3
    %p157 = pnand %p155, %p156
    %p158 = pneg %p157
    // Predicated region
    $region9: #{simple_model_forward.1} parent=5 // pred_check
      _
    $region10: #{simple_model_forward.1} parent=5 // pred_check_branch
      %160 = sbr.rel (%p157) target = $region12
    $region11: #{simple_model_forward.1} parent=5 // pred_region
      %s161 = ssub.s32 %s11, 1
      // Predicated region
      $region13: #{simple_model_forward.1} parent=11 // pred_check
        %p162 = pneg %p58
      $region14: #{simple_model_forward.1} parent=11 // pred_check_branch
        %164 = sbr.rel (%p162) target = $region16
      $region15: #{simple_model_forward.1} parent=11 // pred_region
        _
      $region16: #{simple_model_forward.1} parent=11 // pred_fallthru
        _
      // Predicated region
      $region17: #{simple_model_forward.1} parent=11 // pred_check
        %p165 = pneg %p79
      $region18: #{simple_model_forward.1} parent=11 // pred_check_branch
        %167 = sbr.rel (%p165) target = $region20
      $region19: #{simple_model_forward.1} parent=11 // pred_region
        _
      $region20: #{simple_model_forward.1} parent=11 // pred_fallthru
        _
      // Predicated region
      $region21: #{simple_model_forward.1} parent=11 // pred_check
        %p168 = pneg %p100
      $region22: #{simple_model_forward.1} parent=11 // pred_check_branch
        %170 = sbr.rel (%p168) target = $region24
      $region23: #{simple_model_forward.1} parent=11 // pred_region
        _
      $region24: #{simple_model_forward.1} parent=11 // pred_fallthru
        _
      // Predicated region
      $region25: #{simple_model_forward.1} parent=11 // pred_check
        %p171 = pneg %p121
      $region26: #{simple_model_forward.1} parent=11 // pred_check_branch
        %173 = sbr.rel (%p171) target = $region28
      $region27: #{simple_model_forward.1} parent=11 // pred_region
        _
      $region28: #{simple_model_forward.1} parent=11 // pred_fallthru
        _
    $region12: #{simple_model_forward.1} parent=5 // pred_fallthru
      _
    %p174 = scmp.lt.s32.totalorder %s11, 2
    // Predicated region
    $region29: #{simple_model_forward.1} parent=5 // pred_check
      %p175 = pneg %p174
    $region30: #{simple_model_forward.1} parent=5 // pred_check_branch
      %177 = sbr.rel (%p175) target = $region32
    $region31: #{simple_model_forward.1} parent=5 // pred_region
      // Predicated region
      $region33: #{simple_model_forward.1} parent=31 // pred_check
        %p178 = pneg %p31
      $region34: #{simple_model_forward.1} parent=31 // pred_check_branch
        %180 = sbr.rel (%p178) target = $region36
      $region35: #{simple_model_forward.1} parent=31 // pred_region
        %s181 = smul.u32 16, %s11
        %p182 = scmp.lt.s32.totalorder %s181, 31
        %s183 = scalar_select %p182, %s181, 31
        %s184 = smul.addr %s183, 8
        %s185 = scalar_lea.vmem %s0, %s184
        %s186 = smul.u32 16, %s11
      $region36: #{simple_model_forward.1} parent=31 // pred_fallthru
        _
    $region32: #{simple_model_forward.1} parent=5 // pred_fallthru
      _
    %p187 = scmp.le.s32.totalorder 1, %s11
    %p188 = scmp.lt.s32.totalorder %s11, 3
    %p189 = pnand %p187, %p188
    %p190 = pneg %p189
    // Predicated region
    $region37: #{simple_model_forward.1} parent=5 // pred_check
      _
    $region38: #{simple_model_forward.1} parent=5 // pred_check_branch
      %192 = sbr.rel (%p189) target = $region40
    $region39: #{simple_model_forward.1} parent=5 // pred_region
      %s193 = ssub.s32 %s11, 1
      %s194 = smul.u32 16, %s16
      %p195 = scmp.lt.s32.totalorder %s194, 31
      %s196 = scalar_select %p195, %s194, 31
      %s197 = smul.addr %s196, 8
      %s198 = scalar_lea.vmem %s0, %s197
      %p199 = pneg %p37
      %p200 = pneg %p34
      %p201 = pneg %p58
      %p202 = pneg %p55
      %p203 = pneg %p79
      %p204 = pneg %p76
      %p205 = pneg %p100
      %p206 = pneg %p97
      %p207 = pneg %p121
      %p208 = pneg %p118
      %p209 = pneg %p147
      %p210 = pneg %p144
      %s211 = smul.u32 16, %s16
      %p212 = scmp.lt.s32.totalorder %s211, 31
      %s213 = scalar_select %p212, %s211, 31
      %s214 = smul.addr %s213, 8
      %s215 = scalar_lea.vmem %s5, %s214
      %s216 = smul.u32 16, %s16
      %p217 = scmp.lt.s32.totalorder %s216, 31
      %s218 = scalar_select %p217, %s216, 31
      %s219 = smul.addr %s218, 8
      %s220 = scalar_lea.vmem %s0, %s219
      %s221 = smul.u32 16, %s16
      %s222 = smul.u32 16, %s16
      %p223 = scmp.lt.s32.totalorder %s222, 31
      %s224 = scalar_select %p223, %s222, 31
      %s225 = smul.addr %s224, 8
      %s226 = scalar_lea.vmem %s5, %s225
      %s227 = smul.u32 16, %s16
      %v228 = vld [vmem:[%s220] sm:$0xff]
      %v229 = vld [vmem:[%s220 + $0x8] sm:$0xff]
      %v230 = vld [vmem:[%s220 + $0x10] sm:$0xff]
      %v231 = vld [vmem:[%s220 + $0x18] sm:$0xff]
      %v232 = vld [vmem:[%s220 + $0x20] sm:$0xff]
      %v233 = vld [vmem:[%s220 + $0x28] sm:$0xff]
      %v234 = vld [vmem:[%s220 + $0x30] sm:$0xff]
      %v235 = vld [vmem:[%s220 + $0x38] sm:$0xff]
      %v236 = vld [vmem:[%s220 + $0x40] sm:$0xff]
      %v237 = vld [vmem:[%s220 + $0x48] sm:$0xff]
      %v238 = vld [vmem:[%s220 + $0x50] sm:$0xff]
      %v239 = vld [vmem:[%s220 + $0x58] sm:$0xff]
      %v240 = vld [vmem:[%s220 + $0x60] sm:$0xff]
      %v241 = vld [vmem:[%s220 + $0x68] sm:$0xff]
      %v242 = vld [vmem:[%s220 + $0x70] sm:$0xff]
      %v243 = vld [vmem:[%s220 + $0x78] sm:$0xff]
      %v244 = vld [vmem:[%s1] sm:$0xff]
      %v245 = vld [vmem:[%s1 + $0x8] sm:$0x3]
      %v246 = vld [vmem:[%s2] sm:$0x1]
      %v248 = vlaneseq
      %v249 = vshrl.u32 %v248, 7
      %v250 = vsub.s32 0, %v249
      %v251 = vrot.slane %v246, %v250
      %vm253 = vcmask 80896
      %v255 = vsel %vm253, %v228, 0
      %v258 = vsel %vm253, %v229, 0
      %v261 = vsel %vm253, %v230, 0
      %v264 = vsel %vm253, %v231, 0
      %v267 = vsel %vm253, %v232, 0
      %v270 = vsel %vm253, %v233, 0
      %v273 = vsel %vm253, %v234, 0
      %v276 = vsel %vm253, %v235, 0
      %v279 = vsel %vm253, %v236, 0
      %v282 = vsel %vm253, %v237, 0
      %v285 = vsel %vm253, %v238, 0
      %v288 = vsel %vm253, %v239, 0
      %v291 = vsel %vm253, %v240, 0
      %v294 = vsel %vm253, %v241, 0
      %v297 = vsel %vm253, %v242, 0
      %v300 = vsel %vm253, %v243, 0
      %vm302 = vcmask 1041408
      %v304 = vsel %vm302, %v245, 0
      %306 = vmatprep.subr.mxu0 0.0
      %307 = vmatpush1.msra.mxu0 %v244
      %308 = vmatprep.subr.mxu0 0.0
      %309 = vmatpush1.msra.mxu0 %v304
      %310 = vmatprep.subr.mxu0 0.0
      %311 = vmatpush1.msra.mxu0 0.0
      %312 = vmatprep.subr.mxu0 0.0
      %313 = vmatpush1.msra.mxu0 0.0
      %314 = vmatprep.subr.mxu0 0.0
      %315 = vmatpush1.msra.mxu0 0.0
      %316 = vmatprep.subr.mxu0 0.0
      %317 = vmatpush1.msra.mxu0 0.0
      %318 = vmatprep.subr.mxu0 0.0
      %319 = vmatpush1.msra.mxu0 0.0
      %320 = vmatprep.subr.mxu0 0.0
      %321 = vmatpush1.msra.mxu0 0.0
      %322 = vmatprep.subr.mxu0 0.0
      %323 = vmatpush1.msra.mxu0 0.0
      %324 = vmatprep.subr.mxu0 0.0
      %325 = vmatpush1.msra.mxu0 0.0
      %326 = vmatprep.subr.mxu0 0.0
      %327 = vmatpush1.msra.mxu0 0.0
      %328 = vmatprep.subr.mxu0 0.0
      %329 = vmatpush1.msra.mxu0 0.0
      %330 = vmatprep.subr.mxu0 0.0
      %331 = vmatpush1.msra.mxu0 0.0
      %332 = vmatprep.subr.mxu0 0.0
      %333 = vmatpush1.msra.mxu0 0.0
      %334 = vmatprep.subr.mxu0 0.0
      %335 = vmatpush1.msra.mxu0 0.0
      %336 = vmatprep.subr.mxu0 0.0
      %337 = vmatpush1.msra.mxu0 0.0
      %338 = vmatprep.subr.mxu0 0.0
      %339 = vmatpush1.msra.mxu0 0.0
      %340 = vmatprep.subr.mxu0 0.0
      %341 = vmatpush1.msra.mxu0 0.0
      %342 = vmatprep.subr.mxu0 0.0
      %343 = vmatpush1.msra.mxu0 0.0
      %344 = vmatprep.subr.mxu0 0.0
      %345 = vmatpush1.msra.mxu0 0.0
      %346 = vmatprep.subr.mxu0 0.0
      %347 = vmatpush1.msra.mxu0 0.0
      %348 = vmatprep.subr.mxu0 0.0
      %349 = vmatpush1.msra.mxu0 0.0
      %350 = vmatprep.subr.mxu0 0.0
      %351 = vmatpush1.msra.mxu0 0.0
      %352 = vmatprep.subr.mxu0 0.0
      %353 = vmatpush1.msra.mxu0 0.0
      %354 = vmatprep.subr.mxu0 0.0
      %355 = vmatpush1.msra.mxu0 0.0
      %356 = vmatprep.subr.mxu0 0.0
      %357 = vmatpush1.msra.mxu0 0.0
      %358 = vmatprep.subr.mxu0 0.0
      %359 = vmatpush1.msra.mxu0 0.0
      %360 = vmatprep.subr.mxu0 0.0
      %361 = vmatpush1.msra.mxu0 0.0
      %362 = vmatprep.subr.mxu0 0.0
      %363 = vmatpush1.msra.mxu0 0.0
      %364 = vmatprep.subr.mxu0 0.0
      %365 = vmatpush1.msra.mxu0 0.0
      %366 = vmatprep.subr.mxu0 0.0
      %367 = vmatpush1.msra.mxu0 0.0
      %368 = vmatprep.subr.mxu0 0.0
      %369 = vmatpush1.msra.mxu0 0.0
      %370 = vmatprep.mubr.f32.mxu0 0.0
      %371 = vmatmul.mubr.f32.gmra.mrb[0].mxu0 %v255
      %v372 = vpop.f32.mrb[0].mxu0
      %v373 = vadd.f32 %v251, %v372
      %v374 = vpop.f32.mrb[0].mxu0
      %375 = vmatprep.mubr.f32.mxu0 0.0
      %376 = vmatmul.mubr.f32.gmra.mrb[0].mxu0 %v258
      %v377 = vpop.f32.mrb[0].mxu0
      %v378 = vadd.f32 %v251, %v377
      %v379 = vpop.f32.mrb[0].mxu0
      %380 = vmatprep.mubr.f32.mxu0 0.0
      %381 = vmatmul.mubr.f32.gmra.mrb[0].mxu0 %v261
      %v382 = vpop.f32.mrb[0].mxu0
      %v383 = vadd.f32 %v251, %v382
      %v384 = vpop.f32.mrb[0].mxu0
      %385 = vmatprep.mubr.f32.mxu0 0.0
      %386 = vmatmul.mubr.f32.gmra.mrb[0].mxu0 %v264
      %v387 = vpop.f32.mrb[0].mxu0
      %v388 = vadd.f32 %v251, %v387
      %v389 = vpop.f32.mrb[0].mxu0
      %390 = vmatprep.mubr.f32.mxu0 0.0
      %391 = vmatmul.mubr.f32.gmra.mrb[0].mxu0 %v267
      %v392 = vpop.f32.mrb[0].mxu0
      %v393 = vadd.f32 %v251, %v392
      %v394 = vpop.f32.mrb[0].mxu0
      %395 = vmatprep.mubr.f32.mxu0 0.0
      %396 = vmatmul.mubr.f32.gmra.mrb[0].mxu0 %v270
      %v397 = vpop.f32.mrb[0].mxu0
      %v398 = vadd.f32 %v251, %v397
      %v399 = vpop.f32.mrb[0].mxu0
      %400 = vmatprep.mubr.f32.mxu0 0.0
      %401 = vmatmul.mubr.f32.gmra.mrb[0].mxu0 %v273
      %v402 = vpop.f32.mrb[0].mxu0
      %v403 = vadd.f32 %v251, %v402
      %v404 = vpop.f32.mrb[0].mxu0
      %405 = vmatprep.mubr.f32.mxu0 0.0
      %406 = vmatmul.mubr.f32.gmra.mrb[0].mxu0 %v276
      %v407 = vpop.f32.mrb[0].mxu0
      %v408 = vadd.f32 %v251, %v407
      %v409 = vpop.f32.mrb[0].mxu0
      %410 = vmatprep.mubr.f32.mxu0 0.0
      %411 = vmatmul.mubr.f32.gmra.mrb[0].mxu0 %v279
      %v412 = vpop.f32.mrb[0].mxu0
      %v413 = vadd.f32 %v251, %v412
      %v414 = vpop.f32.mrb[0].mxu0
      %415 = vmatprep.mubr.f32.mxu0 0.0
      %416 = vmatmul.mubr.f32.gmra.mrb[0].mxu0 %v282
      %v417 = vpop.f32.mrb[0].mxu0
      %v418 = vadd.f32 %v251, %v417
      %v419 = vpop.f32.mrb[0].mxu0
      %420 = vmatprep.mubr.f32.mxu0 0.0
      %421 = vmatmul.mubr.f32.gmra.mrb[0].mxu0 %v285
      %v422 = vpop.f32.mrb[0].mxu0
      %v423 = vadd.f32 %v251, %v422
      %v424 = vpop.f32.mrb[0].mxu0
      %425 = vmatprep.mubr.f32.mxu0 0.0
      %426 = vmatmul.mubr.f32.gmra.mrb[0].mxu0 %v288
      %v427 = vpop.f32.mrb[0].mxu0
      %v428 = vadd.f32 %v251, %v427
      %v429 = vpop.f32.mrb[0].mxu0
      %430 = vmatprep.mubr.f32.mxu0 0.0
      %431 = vmatmul.mubr.f32.gmra.mrb[0].mxu0 %v291
      %v432 = vpop.f32.mrb[0].mxu0
      %v433 = vadd.f32 %v251, %v432
      %v434 = vpop.f32.mrb[0].mxu0
      %435 = vmatprep.mubr.f32.mxu0 0.0
      %436 = vmatmul.mubr.f32.gmra.mrb[0].mxu0 %v294
      %v437 = vpop.f32.mrb[0].mxu0
      %v438 = vadd.f32 %v251, %v437
      %v439 = vpop.f32.mrb[0].mxu0
      %440 = vmatprep.mubr.f32.mxu0 0.0
      %441 = vmatmul.mubr.f32.gmra.mrb[0].mxu0 %v297
      %v442 = vpop.f32.mrb[0].mxu0
      %v443 = vadd.f32 %v251, %v442
      %v444 = vpop.f32.mrb[0].mxu0
      %445 = vmatprep.mubr.f32.mxu0 0.0
      %446 = vmatmul.mubr.f32.gmra.mrb[0].mxu0 %v300
      %v447 = vpop.f32.mrb[0].mxu0
      %v448 = vadd.f32 %v251, %v447
      %v449 = vpop.f32.mrb[0].mxu0
      %450 = vdwg.mxu0
      %v451 = vmax.f32 %v373, 0.0
      %v452 = vmax.f32 %v378, 0.0
      %v453 = vmax.f32 %v383, 0.0
      %v454 = vmax.f32 %v388, 0.0
      %v455 = vmax.f32 %v393, 0.0
      %v456 = vmax.f32 %v398, 0.0
      %v457 = vmax.f32 %v403, 0.0
      %v458 = vmax.f32 %v408, 0.0
      %v459 = vmax.f32 %v413, 0.0
      %v460 = vmax.f32 %v418, 0.0
      %v461 = vmax.f32 %v423, 0.0
      %v462 = vmax.f32 %v428, 0.0
      %v463 = vmax.f32 %v433, 0.0
      %v464 = vmax.f32 %v438, 0.0
      %v465 = vmax.f32 %v443, 0.0
      %v466 = vmax.f32 %v448, 0.0
      %v467 = vld [vmem:[%s3] sm:$0xff]
      %v468 = vld [vmem:[%s3 + $0x8] sm:$0xff]
      %v469 = vld [vmem:[%s3 + $0x10] sm:$0xf]
      %v470 = vld [vmem:[%s4] sm:$0x1]
      %v472 = vlaneseq
      %v473 = vshrl.u32 %v472, 7
      %v474 = vsub.s32 0, %v473
      %v475 = vrot.slane %v470, %v474
      %vm477 = vcmask 162816
      %v479 = vsel %vm477, %v451, 0
      %v482 = vsel %vm477, %v452, 0
      %v485 = vsel %vm477, %v453, 0
      %v488 = vsel %vm477, %v454, 0
      %v491 = vsel %vm477, %v455, 0
      %v494 = vsel %vm477, %v456, 0
      %v497 = vsel %vm477, %v457, 0
      %v500 = vsel %vm477, %v458, 0
      %v503 = vsel %vm477, %v459, 0
      %v506 = vsel %vm477, %v460, 0
      %v509 = vsel %vm477, %v461, 0
      %v512 = vsel %vm477, %v462, 0
      %v515 = vsel %vm477, %v463, 0
      %v518 = vsel %vm477, %v464, 0
      %v521 = vsel %vm477, %v465, 0
      %v524 = vsel %vm477, %v466, 0
      %vm526 = vcmask 1043456
      %v528 = vsel %vm526, %v469, 0
      %530 = vmatprep.subr.mxu0 0.0
      %531 = vmatpush1.msra.mxu0 %v467
      %532 = vmatprep.subr.mxu0 0.0
      %533 = vmatpush1.msra.mxu0 %v468
      %534 = vmatprep.subr.mxu0 0.0
      %535 = vmatpush1.msra.mxu0 %v528
      %536 = vmatprep.subr.mxu0 0.0
      %537 = vmatpush1.msra.mxu0 0.0
      %538 = vmatprep.subr.mxu0 0.0
      %539 = vmatpush1.msra.mxu0 0.0
      %540 = vmatprep.subr.mxu0 0.0
      %541 = vmatpush1.msra.mxu0 0.0
      %542 = vmatprep.subr.mxu0 0.0
      %543 = vmatpush1.msra.mxu0 0.0
      %544 = vmatprep.subr.mxu0 0.0
      %545 = vmatpush1.msra.mxu0 0.0
      %546 = vmatprep.subr.mxu0 0.0
      %547 = vmatpush1.msra.mxu0 0.0
      %548 = vmatprep.subr.mxu0 0.0
      %549 = vmatpush1.msra.mxu0 0.0
      %550 = vmatprep.subr.mxu0 0.0
      %551 = vmatpush1.msra.mxu0 0.0
      %552 = vmatprep.subr.mxu0 0.0
      %553 = vmatpush1.msra.mxu0 0.0
      %554 = vmatprep.subr.mxu0 0.0
      %555 = vmatpush1.msra.mxu0 0.0
      %556 = vmatprep.subr.mxu0 0.0
      %557 = vmatpush1.msra.mxu0 0.0
      %558 = vmatprep.subr.mxu0 0.0
      %559 = vmatpush1.msra.mxu0 0.0
      %560 = vmatprep.subr.mxu0 0.0
      %561 = vmatpush1.msra.mxu0 0.0
      %562 = vmatprep.subr.mxu0 0.0
      %563 = vmatpush1.msra.mxu0 0.0
      %564 = vmatprep.subr.mxu0 0.0
      %565 = vmatpush1.msra.mxu0 0.0
      %566 = vmatprep.subr.mxu0 0.0
      %567 = vmatpush1.msra.mxu0 0.0
      %568 = vmatprep.subr.mxu0 0.0
      %569 = vmatpush1.msra.mxu0 0.0
      %570 = vmatprep.subr.mxu0 0.0
      %571 = vmatpush1.msra.mxu0 0.0
      %572 = vmatprep.subr.mxu0 0.0
      %573 = vmatpush1.msra.mxu0 0.0
      %574 = vmatprep.subr.mxu0 0.0
      %575 = vmatpush1.msra.mxu0 0.0
      %576 = vmatprep.subr.mxu0 0.0
      %577 = vmatpush1.msra.mxu0 0.0
      %578 = vmatprep.subr.mxu0 0.0
      %579 = vmatpush1.msra.mxu0 0.0
      %580 = vmatprep.subr.mxu0 0.0
      %581 = vmatpush1.msra.mxu0 0.0
      %582 = vmatprep.subr.mxu0 0.0
      %583 = vmatpush1.msra.mxu0 0.0
      %584 = vmatprep.subr.mxu0 0.0
      %585 = vmatpush1.msra.mxu0 0.0
      %586 = vmatprep.subr.mxu0 0.0
      %587 = vmatpush1.msra.mxu0 0.0
      %588 = vmatprep.subr.mxu0 0.0
      %589 = vmatpush1.msra.mxu0 0.0
      %590 = vmatprep.subr.mxu0 0.0
      %591 = vmatpush1.msra.mxu0 0.0
      %592 = vmatprep.subr.mxu0 0.0
      %593 = vmatpush1.msra.mxu0 0.0
      %594 = vmatprep.mubr.f32.mxu0 0.0
      %595 = vmatmul.mubr.f32.gmra.mrb[0].mxu0 %v479
      %v596 = vpop.f32.mrb[0].mxu0
      %v597 = vadd.f32 %v475, %v596
      %v598 = vpop.f32.mrb[0].mxu0
      %599 = vmatprep.mubr.f32.mxu0 0.0
      %600 = vmatmul.mubr.f32.gmra.mrb[0].mxu0 %v482
      %v601 = vpop.f32.mrb[0].mxu0
      %v602 = vadd.f32 %v475, %v601
      %v603 = vpop.f32.mrb[0].mxu0
      %604 = vmatprep.mubr.f32.mxu0 0.0
      %605 = vmatmul.mubr.f32.gmra.mrb[0].mxu0 %v485
      %v606 = vpop.f32.mrb[0].mxu0
      %v607 = vadd.f32 %v475, %v606
      %v608 = vpop.f32.mrb[0].mxu0
      %609 = vmatprep.mubr.f32.mxu0 0.0
      %610 = vmatmul.mubr.f32.gmra.mrb[0].mxu0 %v488
      %v611 = vpop.f32.mrb[0].mxu0
      %v612 = vadd.f32 %v475, %v611
      %v613 = vpop.f32.mrb[0].mxu0
      %614 = vmatprep.mubr.f32.mxu0 0.0
      %615 = vmatmul.mubr.f32.gmra.mrb[0].mxu0 %v491
      %v616 = vpop.f32.mrb[0].mxu0
      %v617 = vadd.f32 %v475, %v616
      %v618 = vpop.f32.mrb[0].mxu0
      %619 = vmatprep.mubr.f32.mxu0 0.0
      %620 = vmatmul.mubr.f32.gmra.mrb[0].mxu0 %v494
      %v621 = vpop.f32.mrb[0].mxu0
      %v622 = vadd.f32 %v475, %v621
      %v623 = vpop.f32.mrb[0].mxu0
      %624 = vmatprep.mubr.f32.mxu0 0.0
      %625 = vmatmul.mubr.f32.gmra.mrb[0].mxu0 %v497
      %v626 = vpop.f32.mrb[0].mxu0
      %v627 = vadd.f32 %v475, %v626
      %v628 = vpop.f32.mrb[0].mxu0
      %629 = vmatprep.mubr.f32.mxu0 0.0
      %630 = vmatmul.mubr.f32.gmra.mrb[0].mxu0 %v500
      %v631 = vpop.f32.mrb[0].mxu0
      %v632 = vadd.f32 %v475, %v631
      %v633 = vpop.f32.mrb[0].mxu0
      %634 = vmatprep.mubr.f32.mxu0 0.0
      %635 = vmatmul.mubr.f32.gmra.mrb[0].mxu0 %v503
      %v636 = vpop.f32.mrb[0].mxu0
      %v637 = vadd.f32 %v475, %v636
      %v638 = vpop.f32.mrb[0].mxu0
      %639 = vmatprep.mubr.f32.mxu0 0.0
      %640 = vmatmul.mubr.f32.gmra.mrb[0].mxu0 %v506
      %v641 = vpop.f32.mrb[0].mxu0
      %v642 = vadd.f32 %v475, %v641
      %v643 = vpop.f32.mrb[0].mxu0
      %644 = vmatprep.mubr.f32.mxu0 0.0
      %645 = vmatmul.mubr.f32.gmra.mrb[0].mxu0 %v509
      %v646 = vpop.f32.mrb[0].mxu0
      %v647 = vadd.f32 %v475, %v646
      %v648 = vpop.f32.mrb[0].mxu0
      %649 = vmatprep.mubr.f32.mxu0 0.0
      %650 = vmatmul.mubr.f32.gmra.mrb[0].mxu0 %v512
      %v651 = vpop.f32.mrb[0].mxu0
      %v652 = vadd.f32 %v475, %v651
      %v653 = vpop.f32.mrb[0].mxu0
      %654 = vmatprep.mubr.f32.mxu0 0.0
      %655 = vmatmul.mubr.f32.gmra.mrb[0].mxu0 %v515
      %v656 = vpop.f32.mrb[0].mxu0
      %v657 = vadd.f32 %v475, %v656
      %v658 = vpop.f32.mrb[0].mxu0
      %659 = vmatprep.mubr.f32.mxu0 0.0
      %660 = vmatmul.mubr.f32.gmra.mrb[0].mxu0 %v518
      %v661 = vpop.f32.mrb[0].mxu0
      %v662 = vadd.f32 %v475, %v661
      %v663 = vpop.f32.mrb[0].mxu0
      %664 = vmatprep.mubr.f32.mxu0 0.0
      %665 = vmatmul.mubr.f32.gmra.mrb[0].mxu0 %v521
      %v666 = vpop.f32.mrb[0].mxu0
      %v667 = vadd.f32 %v475, %v666
      %v668 = vpop.f32.mrb[0].mxu0
      %669 = vmatprep.mubr.f32.mxu0 0.0
      %670 = vmatmul.mubr.f32.gmra.mrb[0].mxu0 %v524
      %v671 = vpop.f32.mrb[0].mxu0
      %v672 = vadd.f32 %v475, %v671
      %v673 = vpop.f32.mrb[0].mxu0
      %674 = vdwg.mxu0
      %vm675 = vcmask 15360
      %676 = vst.msk [vmem:[%s226] sm:$0xff] %vm675, %v597
      %677 = vst.msk [vmem:[%s226 + $0x8] sm:$0xff] %vm675, %v602
      %678 = vst.msk [vmem:[%s226 + $0x10] sm:$0xff] %vm675, %v607
      %679 = vst.msk [vmem:[%s226 + $0x18] sm:$0xff] %vm675, %v612
      %680 = vst.msk [vmem:[%s226 + $0x20] sm:$0xff] %vm675, %v617
      %681 = vst.msk [vmem:[%s226 + $0x28] sm:$0xff] %vm675, %v622
      %682 = vst.msk [vmem:[%s226 + $0x30] sm:$0xff] %vm675, %v627
      %683 = vst.msk [vmem:[%s226 + $0x38] sm:$0xff] %vm675, %v632
      %684 = vst.msk [vmem:[%s226 + $0x40] sm:$0xff] %vm675, %v637
      %685 = vst.msk [vmem:[%s226 + $0x48] sm:$0xff] %vm675, %v642
      %686 = vst.msk [vmem:[%s226 + $0x50] sm:$0xff] %vm675, %v647
      %687 = vst.msk [vmem:[%s226 + $0x58] sm:$0xff] %vm675, %v652
      %688 = vst.msk [vmem:[%s226 + $0x60] sm:$0xff] %vm675, %v657
      %689 = vst.msk [vmem:[%s226 + $0x68] sm:$0xff] %vm675, %v662
      %690 = vst.msk [vmem:[%s226 + $0x70] sm:$0xff] %vm675, %v667
      %691 = vst.msk [vmem:[%s226 + $0x78] sm:$0xff] %vm675, %v672
      %s692 = smul.u32 16, %s16
      %p693 = scmp.lt.s32.totalorder %s692, 31
      %s694 = scalar_select %p693, %s692, 31
      %s695 = smul.addr %s694, 8
      %s696 = scalar_lea.vmem %s5, %s695
      // Predicated region
      $region41: #{simple_model_forward.1} parent=39 // pred_check
        %p697 = pneg %p144
      $region42: #{simple_model_forward.1} parent=39 // pred_check_branch
        %699 = sbr.rel (%p697) target = $region44
      $region43: #{simple_model_forward.1} parent=39 // pred_region
        %s700 = smul.u32 16, %s16
      $region44: #{simple_model_forward.1} parent=39 // pred_fallthru
        _
    $region40: #{simple_model_forward.1} parent=5 // pred_fallthru
      _
    %p701 = scmp.le.s32.totalorder 2, %s11
    // Predicated region
    $region45: #{simple_model_forward.1} parent=5 // pred_check
      %p702 = pneg %p701
    $region46: #{simple_model_forward.1} parent=5 // pred_check_branch
      %704 = sbr.rel (%p702) target = $region48
    $region47: #{simple_model_forward.1} parent=5 // pred_region
      %s705 = ssub.s32 %s11, 2
      // Predicated region
      $region49: #{simple_model_forward.1} parent=47 // pred_check
        %p706 = pneg %p150
      $region50: #{simple_model_forward.1} parent=47 // pred_check_branch
        %708 = sbr.rel (%p706) target = $region52
      $region51: #{simple_model_forward.1} parent=47 // pred_region
        %s709 = smul.u32 16, %s17
        %p710 = scmp.lt.s32.totalorder %s709, 31
        %s711 = scalar_select %p710, %s709, 31
        %s712 = smul.addr %s711, 8
        %s713 = scalar_lea.vmem %s5, %s712
      $region52: #{simple_model_forward.1} parent=47 // pred_fallthru
        _
    $region48: #{simple_model_forward.1} parent=5 // pred_fallthru
      _
  $region6: #{simple_model_forward.1} parent=0 // loop_footer
    %s15 = sadd.s32 1, %s11
  $region7: #{simple_model_forward.1} parent=0 // loop_footer_branch
    %10 = sbr.rel target = $region3
  $region8: #{simple_model_forward.1} parent=0 // loop_exit
    _

</llo_original>
